<compile_context>
chip_gen: v5e
topology: v5e:2x2
jax: 0.10.0
libtpu: 0.0.40
codegen_flags: <defaults>
</compile_context>

<pallas_src>
import jax
import jax.numpy as jnp
from jax import lax
from jax.experimental import pallas as pl
from jax.experimental.pallas import tpu as pltpu


def inception_kernel(x_ref, w_ref, shift_ref, out_ref):
    # x_ref    : (Kp, T)      bf16  im2col activations (contraction rows, lane columns)
    # w_ref    : (Coutp, Kp)  bf16  BN-scale-folded combined 1x1+3x3 weights
    # shift_ref: (Coutp, 1)   f32   folded BN shift (absorbs conv bias)
    # out_ref  : (Coutp, T)   f32 (or bf16)  rows = channel concat, cols = n*HW + spatial
    y = jnp.dot(w_ref[...], x_ref[...], preferred_element_type=jnp.float32)
    out_ref[...] = jnp.maximum(y + shift_ref[...], 0.0).astype(out_ref.dtype)


def _round_up(x, m):
    return ((x + m - 1) // m) * m


def inception_forward(x_nchw, w1, b1, g1, be1, w3, b3, g3, be3,
                      rm1=None, rv1=None, rm3=None, rv3=None,
                      eps=1e-5, out_dtype=jnp.float32):
    """x_nchw: (N, Cin, H, W) f32.  PyTorch layouts: w1 (C1,Cin,1,1), w3 (C3,Cin,3,3),
       b*: conv bias, g*/be*: BN gamma/beta, rm*/rv*: BN running mean/var (optional)."""
    N, Cin, H, W = x_nchw.shape
    C1, C3 = w1.shape[0], w3.shape[0]
    Cout = C1 + C3
    HW = H * W
    K = 9 * Cin
    Kp = _round_up(K, 16)        # bf16 sublane packing on the contraction dim
    Coutp = _round_up(Cout, 16)  # keep weight rows / output rows full-width for any C1/C3

    if rm1 is None: rm1 = jnp.zeros((C1,), jnp.float32)
    if rv1 is None: rv1 = jnp.ones((C1,), jnp.float32)
    if rm3 is None: rm3 = jnp.zeros((C3,), jnp.float32)
    if rv3 is None: rv3 = jnp.ones((C3,), jnp.float32)

    # ---- im2col with batch collapsed into lanes: X[t*Cin+ci, n*HW + i*W+j]
    #      bf16 cast BEFORE the 9x expansion; transpose done on the 1x padded tensor.
    x_pad = jnp.pad(x_nchw.astype(jnp.bfloat16), ((0, 0), (0, 0), (1, 1), (1, 1)))
    x_pad = jnp.transpose(x_pad, (1, 0, 2, 3))                       # (Cin, N, H+2, W+2)
    taps = [x_pad[:, :, dy:dy + H, dx:dx + W] for dy in range(3) for dx in range(3)]
    x_cols = jnp.stack(taps, axis=0).reshape(K, N * HW)              # tap-major/ch-minor rows

    # ---- lane tiling: big lane-dense slabs, sized against v7x's 64 MiB physical VMEM
    lane_total = N * HW
    lane_total_p = _round_up(lane_total, 128)

    def step_vmem_bytes(t):
        # double-buffered x (bf16) + out (count f32, conservative) + weight + shift
        return 2 * (Kp * t * 2 + Coutp * t * 4 + Coutp * Kp * 2 + Coutp * 128 * 4)

    VMEM_CAP = 44 * 1024 * 1024
    lane_tile = min(2048, lane_total_p)
    while lane_tile > 128 and step_vmem_bytes(lane_tile) > VMEM_CAP:
        lane_tile = max(128, (lane_tile // 2) // 128 * 128)
    n_tiles = pl.cdiv(lane_total_p, lane_tile)                       # >= 2 at production sizes
    lane_padded = n_tiles * lane_tile

    x_cols = jnp.pad(x_cols, ((0, Kp - K), (0, lane_padded - lane_total)))

    # ---- combined weight: rows [0,C1) = 1x1 branch (centre-tap columns), [C1,Cout) = 3x3
    w1_rows = jnp.pad(w1[:, :, 0, 0], ((0, 0), (4 * Cin, 4 * Cin)))  # (C1, 9*Cin)
    w3_rows = jnp.transpose(w3, (0, 2, 3, 1)).reshape(C3, K)         # (C3, 9*Cin)
    w_comb = jnp.concatenate([w1_rows, w3_rows], axis=0)             # (Cout, 9*Cin)

    # ---- fold inference-form BN (running stats) + conv bias into per-channel scale/shift
    gamma = jnp.concatenate([g1, g3])
    beta = jnp.concatenate([be1, be3])
    bias = jnp.concatenate([b1, b3])
    rmean = jnp.concatenate([rm1, rm3])
    rvar = jnp.concatenate([rv1, rv3])
    scale = gamma / jnp.sqrt(rvar + eps)
    shift = beta + scale * (bias - rmean)
    w_scaled = jnp.pad(w_comb * scale[:, None],
                       ((0, Coutp - Cout), (0, Kp - K))).astype(jnp.bfloat16)
    shift_col = jnp.pad(shift, (0, Coutp - Cout)).reshape(Coutp, 1).astype(jnp.float32)

    vmem_limit = int(min(48 * 1024 * 1024,
                         max(2 * step_vmem_bytes(lane_tile), 8 * 1024 * 1024)))

    out_flat = pl.pallas_call(
        inception_kernel,
        out_shape=jax.ShapeDtypeStruct((Coutp, lane_padded), out_dtype),
        grid_spec=pltpu.PrefetchScalarGridSpec(
            num_scalar_prefetch=0,
            grid=(n_tiles,),
            in_specs=[
                pl.BlockSpec((Kp, lane_tile), lambda t: (0, t)),
                pl.BlockSpec((Coutp, Kp), lambda t: (0, 0)),
                pl.BlockSpec((Coutp, 1), lambda t: (0, 0)),
            ],
            out_specs=pl.BlockSpec((Coutp, lane_tile), lambda t: (0, t)),
        ),
        compiler_params=pltpu.CompilerParams(
            dimension_semantics=("parallel",),
            vmem_limit_bytes=vmem_limit),
    )(x_cols, w_scaled, shift_col)

    out = out_flat[:Cout, :lane_total].reshape(Cout, N, H, W)
    return jnp.transpose(out, (1, 0, 2, 3))                          # -> NCHW


def _reference(x, w1, b1, g1, be1, w3, b3, g3, be3,
               rm1=None, rv1=None, rm3=None, rv3=None, eps=1e-5):
    """Pure-JAX NCHW reference (eval-mode BN, f32 HIGHEST precision) for verification."""
    C1, C3 = w1.shape[0], w3.shape[0]
    if rm1 is None: rm1 = jnp.zeros((C1,), jnp.float32)
    if rv1 is None: rv1 = jnp.ones((C1,), jnp.float32)
    if rm3 is None: rm3 = jnp.zeros((C3,), jnp.float32)
    if rv3 is None: rv3 = jnp.ones((C3,), jnp.float32)

    def conv(x, w, b, pad):
        y = lax.conv_general_dilated(
            x, w, window_strides=(1, 1), padding=((pad, pad), (pad, pad)),
            dimension_numbers=("NCHW", "OIHW", "NCHW"),
            precision=lax.Precision.HIGHEST)
        return y + b.reshape(1, -1, 1, 1)

    def bn_relu(y, g, be, rm, rv):
        s = (g / jnp.sqrt(rv + eps)).reshape(1, -1, 1, 1)
        sh = (be - (g / jnp.sqrt(rv + eps)) * rm).reshape(1, -1, 1, 1)
        return jnp.maximum(y * s + sh, 0.0)

    y1 = bn_relu(conv(x, w1, b1, 0), g1, be1, rm1, rv1)
    y3 = bn_relu(conv(x, w3, b3, 1), g3, be3, rm3, rv3)
    return jnp.concatenate([y1, y3], axis=1)


if __name__ == "__main__":
    # small shapes consistent with the module: batch=2, in_channels=4, 16x16 spatial
    N, Cin, H, W = 2, 4, 16, 16
    C1, C3 = 8, 8

    key = jax.random.PRNGKey(0)
    k = jax.random.split(key, 6)
    x = jax.random.normal(k[0], (N, Cin, H, W), jnp.float32)

    # deterministic parameter init (shapes match nn.Conv2d / nn.BatchNorm2d)
    w1 = jax.random.normal(k[1], (C1, Cin, 1, 1), jnp.float32) * 0.1
    b1 = jax.random.normal(k[2], (C1,), jnp.float32) * 0.1
    w3 = jax.random.normal(k[3], (C3, Cin, 3, 3), jnp.float32) * 0.1
    b3 = jax.random.normal(k[4], (C3,), jnp.float32) * 0.1
    g1 = jnp.ones((C1,), jnp.float32)
    be1 = jnp.zeros((C1,), jnp.float32)
    g3 = jnp.ones((C3,), jnp.float32)
    be3 = jnp.zeros((C3,), jnp.float32)

    out = inception_forward(x, w1, b1, g1, be1, w3, b3, g3, be3)
    out = jax.block_until_ready(out)

    ref = _reference(x, w1, b1, g1, be1, w3, b3, g3, be3)
    assert out.shape == (N, C1 + C3, H, W), out.shape
    # bf16 MXU operands (f32 accumulation) -> tolerance is bf16-level, not f32-level;
    # note the 1x1 branch also inherits bf16 rounding from the shared fused matmul.
    max_err = float(jnp.abs(out - ref).max())
    assert jnp.allclose(out, ref, atol=2e-2, rtol=2e-2), max_err

    print("KERNEL_OK")
</pallas_src>

<mosaic_0001>
module attributes {stable_mosaic.version = 11 : i64} {
  func.func @inception_kernel(%arg0: i32, %arg1: memref<48x512xbf16, #tpu.memory_space<vmem>>, %arg2: memref<16x48xbf16, #tpu.memory_space<vmem>>, %arg3: memref<16x1xf32, #tpu.memory_space<vmem>>, %arg4: memref<16x512xf32, #tpu.memory_space<vmem>>) attributes {dimension_semantics = [#tpu.dimension_semantics<parallel>], iteration_bounds = array<i64: 1>, scalar_prefetch = 0 : i64, scratch_operands = 0 : i64, tpu.core_type = #tpu.core_type<tc>, window_params = [{transform_indices = @transform_0, window_bounds = array<i64: 48, 512>}, {pipeline_mode = #tpu.pipeline_mode<synchronous>, transform_indices = @transform_1, window_bounds = array<i64: 16, 48>}, {pipeline_mode = #tpu.pipeline_mode<synchronous>, transform_indices = @transform_2, window_bounds = array<i64: 16, 1>}, {transform_indices = @transform_3, window_bounds = array<i64: 16, 512>}]} {
    %c0 = arith.constant 0 : index
    %c0_0 = arith.constant 0 : index
    %0 = vector.load %arg2[%c0, %c0_0] : memref<16x48xbf16, #tpu.memory_space<vmem>>, vector<16x48xbf16>
    %c0_1 = arith.constant 0 : index
    %c0_2 = arith.constant 0 : index
    %1 = vector.load %arg1[%c0_1, %c0_2] : memref<48x512xbf16, #tpu.memory_space<vmem>>, vector<48x512xbf16>
    %cst = arith.constant dense<0.000000e+00> : vector<16x512xf32>
    %2 = tpu.matmul %0, %1, %cst {dimension_numbers = #tpu.dot_dimension_numbers<[1], [0], [0], [1], [0, 0, 1, 1], [], []>} : vector<16x48xbf16>, vector<48x512xbf16>, vector<16x512xf32> -> vector<16x512xf32>
    %c0_3 = arith.constant 0 : index
    %c0_4 = arith.constant 0 : index
    %3 = vector.load %arg3[%c0_3, %c0_4] : memref<16x1xf32, #tpu.memory_space<vmem>>, vector<16x1xf32>
    %4 = vector.broadcast %3 : vector<16x1xf32> to vector<16x512xf32>
    %5 = arith.addf %2, %4 : vector<16x512xf32>
    %cst_5 = arith.constant 0.000000e+00 : f32
    %6 = vector.broadcast %cst_5 : f32 to vector<16x512xf32>
    %7 = arith.maximumf %5, %6 : vector<16x512xf32>
    %c0_6 = arith.constant 0 : index
    %c0_7 = arith.constant 0 : index
    %8 = vector.load %arg4[%c0_6, %c0_7] : memref<16x512xf32, #tpu.memory_space<vmem>>, vector<16x512xf32>
    tpu.vector_store %arg4[%c0_6, %c0_7], %7 {strides = array<i32>} : memref<16x512xf32, #tpu.memory_space<vmem>>, vector<16x512xf32>,
    return
  }
  func.func @transform_0(%arg0: i32) -> (i32, i32) {
    %c0_i32 = arith.constant 0 : i32
    %c0_i32_0 = arith.constant 0 : i32
    return %c0_i32, %arg0 : i32, i32
  }
  func.func @transform_1(%arg0: i32) -> (i32, i32) {
    %c0_i32 = arith.constant 0 : i32
    %c0_i32_0 = arith.constant 0 : i32
    %c0_i32_1 = arith.constant 0 : i32
    return %c0_i32, %c0_i32_0 : i32, i32
  }
  func.func @transform_2(%arg0: i32) -> (i32, i32) {
    %c0_i32 = arith.constant 0 : i32
    %c0_i32_0 = arith.constant 0 : i32
    %c0_i32_1 = arith.constant 0 : i32
    return %c0_i32, %c0_i32_0 : i32, i32
  }
  func.func @transform_3(%arg0: i32) -> (i32, i32) {
    %c0_i32 = arith.constant 0 : i32
    %c0_i32_0 = arith.constant 0 : i32
    return %c0_i32, %arg0 : i32, i32
  }
}

</mosaic_0001>

<llo_original>
// kernel: tpu_custom_call.1
$region0: #{tpu_custom_call.1}
  #allocation0 [shape = 'u32[]', space=smem, size = 0x4, offset = 0x4, fixed_abs, tag = 'smem constant byte address 0x4 - core index']
  #allocation1 [shape = 'u32[72,128]{1,0:T(1,128)}', space=vmem, size = 0x9000, scoped, tag = 'internal scratch']
  %s0 = inlined_call_operand.hbm [shape: bf16[48,512], index: 0, kind: input, shape index: {}]
  %s1 = inlined_call_operand.vmem [shape: bf16[16,48], index: 1, kind: input, shape index: {}]
  %s2 = inlined_call_operand.vmem [shape: f32[16,1], index: 2, kind: input, shape index: {}]
  %s3 = inlined_call_operand.hbm [shape: f32[16,512], index: 3, kind: output, shape index: {}]
  %s4 = sld [smem:[#allocation0]]
  $region26: #{tpu_custom_call.1} parent=0
    _
  %s6 = ssub.s32 1, %s4
  %s7 = scalar_select 0, %s6, %s4
  $region1: #{tpu_custom_call.1} parent=0
    #allocation2 [shape = 'u8[49152]{0}', space=vmem, size = 0xc000, scoped, tag = 'input window, operand 0, single buffered']
    #allocation3 [shape = 's32[1]{0}', space=sflag, size = 0x4, scoped, tag = 'scoped memory for tpu_custom_call.1']
    #allocation4 [shape = 's32[1]{0}', space=sflag, size = 0x4, scoped, tag = 'scoped memory for tpu_custom_call.1']
    #allocation5 [shape = 'u8[32768]{0}', space=vmem, size = 0x8000, scoped, tag = 'output window, operand 0, single buffered']
    %8 = vsyncpa [#allocation3], 0
    %9 = vsyncpa [#allocation4], 0
    // Predicated region
    $region2: #{tpu_custom_call.1} parent=1 // pred_check
      _
    $region3: #{tpu_custom_call.1} parent=1 // pred_check_branch
      %11 = sbr.rel (0) target = $region5
    $region4: #{tpu_custom_call.1} parent=1 // pred_region
      %13 = vsyncadd [#allocation3], 0
      %s14 = sshll.u32 %s0, 4
      %s15 = int_to_ptr.hbm [resolvable:$true] %s14
      %s16 = sshll.u32 [#allocation2], 4
      %s17 = int_to_ptr.vmem [resolvable:$true] %s16
      %22 = dma.hbm_to_vmem [thread:$0]  %s15, 1536, %s17, [#allocation3], 256, 256, 16
    $region5: #{tpu_custom_call.1} parent=1 // pred_fallthru
      _
    // Predicated region
    $region6: #{tpu_custom_call.1} parent=1 // pred_check
      _
    $region7: #{tpu_custom_call.1} parent=1 // pred_check_branch
      %24 = sbr.rel (0) target = $region9
    $region8: #{tpu_custom_call.1} parent=1 // pred_region
      _
    $region9: #{tpu_custom_call.1} parent=1 // pred_fallthru
      _
    // Predicated region
    $region10: #{tpu_custom_call.1} parent=1 // pred_check
      _
    $region11: #{tpu_custom_call.1} parent=1 // pred_check_branch
      %26 = sbr.rel (0) target = $region13
    $region12: #{tpu_custom_call.1} parent=1 // pred_region
      _
    $region13: #{tpu_custom_call.1} parent=1 // pred_fallthru
      _
    // Predicated region
    $region14: #{tpu_custom_call.1} parent=1 // pred_check
      _
    $region15: #{tpu_custom_call.1} parent=1 // pred_check_branch
      %28 = sbr.rel (0) target = $region17
    $region16: #{tpu_custom_call.1} parent=1 // pred_region
      %30 = dma.done [#allocation3], 1536
    $region17: #{tpu_custom_call.1} parent=1 // pred_fallthru
      _
    %v32 = vld [vmem:[%s1] sm:$0xf]
    %v33 = vld [vmem:[%s1 + $0x4] sm:$0xf]
    %v34 = vld [vmem:[#allocation2] sm:$0xff]
    %v35 = vld [vmem:[#allocation2 + $0x8] sm:$0xff]
    %v36 = vld [vmem:[#allocation2 + $0x10] sm:$0xff]
    %v37 = vld [vmem:[#allocation2 + $0x18] sm:$0xff]
    %v38 = vld [vmem:[#allocation2 + $0x20] sm:$0xff]
    %v39 = vld [vmem:[#allocation2 + $0x28] sm:$0xff]
    %v40 = vld [vmem:[#allocation2 + $0x30] sm:$0xff]
    %v41 = vld [vmem:[#allocation2 + $0x38] sm:$0xff]
    %v42 = vld [vmem:[#allocation2 + $0x40] sm:$0xff]
    %v43 = vld [vmem:[#allocation2 + $0x48] sm:$0xff]
    %v44 = vld [vmem:[#allocation2 + $0x50] sm:$0xff]
    %v45 = vld [vmem:[#allocation2 + $0x58] sm:$0xff]
    %v46 = vld [vmem:[%s2] sm:$0xff]
    %v47 = vld [vmem:[%s2 + $0x8] sm:$0xff]
    %49 = vset.pattern.permute.xlu0 0
    %50 = vperm.xlu0 %49, %v46
    %v51 = vpop.permute.xlu0 %50
    %54 = vset.pattern.permute.xlu0 0
    %55 = vperm.xlu0 %54, %v47
    %v56 = vpop.permute.xlu0 %55
    %v60 = vunpack.c.l.b16 %v32
    %v61 = vunpack.c.l.b16 %v33
    %v62 = vpack.c.b16 %v61, %v60
    %v75 = vunpack.c.l.b16 %v34
    %v76 = vunpack.c.h.b16 %v34
    %v77 = vunpack.c.l.b16 %v35
    %v78 = vunpack.c.h.b16 %v35
    %v79 = vunpack.c.l.b16 %v36
    %v80 = vunpack.c.h.b16 %v36
    %v81 = vunpack.c.l.b16 %v37
    %v82 = vunpack.c.h.b16 %v37
    %v83 = vunpack.c.l.b16 %v38
    %v84 = vunpack.c.h.b16 %v38
    %v85 = vunpack.c.l.b16 %v39
    %v86 = vunpack.c.h.b16 %v39
    %v87 = vunpack.c.l.b16 %v40
    %v88 = vunpack.c.h.b16 %v40
    %v89 = vunpack.c.l.b16 %v41
    %v90 = vunpack.c.h.b16 %v41
    %v91 = vunpack.c.l.b16 %v42
    %v92 = vunpack.c.h.b16 %v42
    %v93 = vunpack.c.l.b16 %v43
    %v94 = vunpack.c.h.b16 %v43
    %v95 = vunpack.c.l.b16 %v44
    %v96 = vunpack.c.h.b16 %v44
    %v97 = vunpack.c.l.b16 %v45
    %v98 = vunpack.c.h.b16 %v45
    %v99 = vpack.c.b16 %v79, %v75
    %v100 = vpack.c.b16 %v80, %v76
    %v101 = vpack.c.b16 %v81, %v77
    %v102 = vpack.c.b16 %v82, %v78
    %v103 = vpack.c.b16 %v87, %v83
    %v104 = vpack.c.b16 %v88, %v84
    %v105 = vpack.c.b16 %v89, %v85
    %v106 = vpack.c.b16 %v90, %v86
    %v107 = vpack.c.b16 %v95, %v91
    %v108 = vpack.c.b16 %v96, %v92
    %v109 = vpack.c.b16 %v97, %v93
    %v110 = vpack.c.b16 %v98, %v94
    %vm123 = vcmask 392192
    %v125 = vsel %vm123, %v62, 0
    %127 = vmatpush.bf16.msra.mxu0 0
    %128 = vmatpush.bf16.msra.mxu0 0
    %129 = vmatpush.bf16.msra.mxu0 0
    %130 = vmatpush.bf16.msra.mxu0 0
    %131 = vmatpush.bf16.msra.mxu0 0
    %132 = vmatpush.bf16.msra.mxu0 %v107
    %133 = vmatpush.bf16.msra.mxu0 %v103
    %134 = vmatpush.bf16.msra.mxu0 %v99
    %135 = vmatmul.bf16.gmra.mxu0 %v125
    %v136 = vpop.f32.mrf.mxu0
    %v137 = vadd.f32 %v51, %v136
    %v138 = vpop.f32.mrf.mxu0
    %v139 = vadd.f32 %v56, %v138
    %140 = vdwg.mxu0
    %141 = vmatpush.bf16.msra.mxu0 0
    %142 = vmatpush.bf16.msra.mxu0 0
    %143 = vmatpush.bf16.msra.mxu0 0
    %144 = vmatpush.bf16.msra.mxu0 0
    %145 = vmatpush.bf16.msra.mxu0 0
    %146 = vmatpush.bf16.msra.mxu0 %v108
    %147 = vmatpush.bf16.msra.mxu0 %v104
    %148 = vmatpush.bf16.msra.mxu0 %v100
    %149 = vmatmul.bf16.gmra.mxu0 %v125
    %v150 = vpop.f32.mrf.mxu0
    %v151 = vadd.f32 %v51, %v150
    %v152 = vpop.f32.mrf.mxu0
    %v153 = vadd.f32 %v56, %v152
    %154 = vdwg.mxu0
    %155 = vmatpush.bf16.msra.mxu0 0
    %156 = vmatpush.bf16.msra.mxu0 0
    %157 = vmatpush.bf16.msra.mxu0 0
    %158 = vmatpush.bf16.msra.mxu0 0
    %159 = vmatpush.bf16.msra.mxu0 0
    %160 = vmatpush.bf16.msra.mxu0 %v109
    %161 = vmatpush.bf16.msra.mxu0 %v105
    %162 = vmatpush.bf16.msra.mxu0 %v101
    %163 = vmatmul.bf16.gmra.mxu0 %v125
    %v164 = vpop.f32.mrf.mxu0
    %v165 = vadd.f32 %v51, %v164
    %v166 = vpop.f32.mrf.mxu0
    %v167 = vadd.f32 %v56, %v166
    %168 = vdwg.mxu0
    %169 = vmatpush.bf16.msra.mxu0 0
    %170 = vmatpush.bf16.msra.mxu0 0
    %171 = vmatpush.bf16.msra.mxu0 0
    %172 = vmatpush.bf16.msra.mxu0 0
    %173 = vmatpush.bf16.msra.mxu0 0
    %174 = vmatpush.bf16.msra.mxu0 %v110
    %175 = vmatpush.bf16.msra.mxu0 %v106
    %176 = vmatpush.bf16.msra.mxu0 %v102
    %177 = vmatmul.bf16.gmra.mxu0 %v125
    %v178 = vpop.f32.mrf.mxu0
    %v179 = vadd.f32 %v51, %v178
    %v180 = vpop.f32.mrf.mxu0
    %v181 = vadd.f32 %v56, %v180
    %182 = vdwg.mxu0
    %v183 = vmax.f32 %v137, 0.0
    %v184 = vmax.f32 %v151, 0.0
    %v185 = vmax.f32 %v165, 0.0
    %v186 = vmax.f32 %v179, 0.0
    %v187 = vmax.f32 %v139, 0.0
    %v188 = vmax.f32 %v153, 0.0
    %v189 = vmax.f32 %v167, 0.0
    %v190 = vmax.f32 %v181, 0.0
    %191 = vst [vmem:[#allocation5] sm:$0xff] %v183
    %192 = vst [vmem:[#allocation5 + $0x8] sm:$0xff] %v184
    %193 = vst [vmem:[#allocation5 + $0x10] sm:$0xff] %v185
    %194 = vst [vmem:[#allocation5 + $0x18] sm:$0xff] %v186
    %195 = vst [vmem:[#allocation5 + $0x20] sm:$0xff] %v187
    %196 = vst [vmem:[#allocation5 + $0x28] sm:$0xff] %v188
    %197 = vst [vmem:[#allocation5 + $0x30] sm:$0xff] %v189
    %198 = vst [vmem:[#allocation5 + $0x38] sm:$0xff] %v190
    // Predicated region
    $region18: #{tpu_custom_call.1} parent=1 // pred_check
      _
    $region19: #{tpu_custom_call.1} parent=1 // pred_check_branch
      %200 = sbr.rel (0) target = $region21
    $region20: #{tpu_custom_call.1} parent=1 // pred_region
      %202 = vsyncadd [#allocation4], 0
      %s203 = sshll.u32 [#allocation5], 4
      %s204 = int_to_ptr.vmem [resolvable:$true] %s203
      %s205 = sshll.u32 %s3, 4
      %s206 = int_to_ptr.hbm [resolvable:$true] %s205
      %211 = dma.vmem_to_hbm [thread:$0]  %s204, 1024, %s206, [#allocation4], 512, 512, 32
    $region21: #{tpu_custom_call.1} parent=1 // pred_fallthru
      _
    // Predicated region
    $region22: #{tpu_custom_call.1} parent=1 // pred_check
      _
    $region23: #{tpu_custom_call.1} parent=1 // pred_check_branch
      %213 = sbr.rel (0) target = $region25
    $region24: #{tpu_custom_call.1} parent=1 // pred_region
      %215 = dma.done [#allocation4], 1024
    $region25: #{tpu_custom_call.1} parent=1 // pred_fallthru
      _
    %216 = vsyncpa [#allocation3], 1
    %217 = vsyncpa [#allocation4], 1

</llo_original>
